<compile_context>
chip_gen: v7x
topology: tpu7x:2x2x1
jax: 0.10.0
libtpu: 0.0.40
codegen_flags: <defaults>
</compile_context>

<pallas_src>
import functools

import jax
import jax.numpy as jnp
from jax.experimental import pallas as pl
from jax.experimental.pallas import tpu as pltpu


def _gelu_tanh_f32(z):
    # tanh-approximate GELU in f32 (tanh maps to the EUP slot — nearly free).
    # TODO(synk): PyTorch F.gelu defaults to the erf-exact form; the tanh
    # approximation (guaranteed Mosaic lowering) differs by <~1e-3.
    c = 0.7978845608028654  # sqrt(2/pi)
    return 0.5 * z * (1.0 + jnp.tanh(c * (z + 0.044715 * (z * z * z))))


def _linear_gelu_kernel(x_ref, w_ref, b_ref, o_ref, acc_ref, *, mxu_dtype):
    """One (i, j, k) grid step of fused gelu(x @ W^T + b).

    x_ref  : [tm, tk]  input tile
    w_ref  : [tk, tn]  pre-transposed weight tile ([K, N] layout, ideally bf16)
    b_ref  : [1,  tn]  bias tile (broadcast over rows)
    o_ref  : [tm, tn]  output tile
    acc_ref: [tm, tn]  f32 accumulator scratch (persists across k)
    """
    k = pl.program_id(2)

    @pl.when(k == 0)
    def _():
        # Fold the bias into the accumulator init (the k==0 write happens anyway).
        acc_ref[...] = jnp.broadcast_to(
            b_ref[...].astype(jnp.float32), acc_ref.shape
        )

    xt = x_ref[...]
    wt = w_ref[...]
    # Only cast what is not already in the MXU dtype (weight/x should arrive
    # as bf16 from HBM; the cast here is a no-op in that case).
    if mxu_dtype is not None:
        md = jnp.dtype(mxu_dtype)
        if xt.dtype != md:
            xt = xt.astype(md)
        if wt.dtype != md:
            wt = wt.astype(md)

    # Canonical MXU contraction: [tm, tk] @ [tk, tn] -> [tm, tn], f32 accum.
    acc_ref[...] += jnp.dot(xt, wt, preferred_element_type=jnp.float32)

    @pl.when(k == pl.num_programs(2) - 1)
    def _():
        # Epilogue in f32 (bias already folded in), single cast on store.
        o_ref[...] = _gelu_tanh_f32(acc_ref[...]).astype(o_ref.dtype)


def _round_up(v, m):
    return ((v + m - 1) // m) * m


def _pick_tile(dim, cap, align, min_tile):
    """Tile size: multiple of `align`, <= cap.

    Prefers a divisor of the align-rounded dim (no padding); if the only
    divisors are too small (< min_tile), returns `cap` and the caller pads the
    dimension up to a multiple of it.  Never returns the raw (possibly huge)
    dimension, so tiles can't blow VMEM.
    """
    dim_a = _round_up(dim, align)
    if dim_a <= cap:
        return dim_a
    t = (cap // align) * align
    while t >= align:
        if dim_a % t == 0 and t >= min_tile:
            return t
        t -= align
    return cap


def prepare_linear_gelu_params(weight, bias, *, param_dtype=jnp.bfloat16):
    """One-time 'model load' prep for an nn.Linear:

    weight [N, K] -> transposed, persistent bf16 copy [K, N] so the kernel
    streams bf16 from HBM with no per-step transpose or cast; bias kept f32.
    Pass param_dtype=jnp.float32 for strict-parity (no bf16 matmul) use.
    """
    w_kn = jnp.asarray(weight).T.astype(param_dtype)
    b = jnp.asarray(bias).astype(jnp.float32)
    return w_kn, b


@functools.partial(
    jax.jit, static_argnames=("tm", "tn", "tk", "mxu_dtype", "out_dtype"))
def linear_gelu(x, w_kn, bias, *, tm=None, tn=None, tk=None,
                mxu_dtype=jnp.bfloat16, out_dtype=None):
    """Fused linear + GELU:  gelu(x @ W^T + b).

    x      : [..., K]
    w_kn   : [K, N]  pre-transposed weight (see prepare_linear_gelu_params)
    bias   : [N]
    returns: [..., N]  (dtype = out_dtype or x.dtype)

    mxu_dtype=None is the strict-parity escape hatch: no in-kernel casts, the
    matmul runs in the operands' own dtype.
    """
    *lead, K = x.shape
    K2, N = w_kn.shape
    assert K == K2 and bias.shape == (N,), (x.shape, w_kn.shape, bias.shape)

    out_dtype = out_dtype or x.dtype

    x2 = x.reshape(-1, K)
    M = x2.shape[0]

    # Tile selection: big, lane-aligned tiles (AI = 2/((1/tm+1/tn)*itemsize)),
    # tk >= 512 so the accumulator read-modify-write hides under the MXU.
    tm = tm or _pick_tile(M, cap=512, align=8, min_tile=64)
    tn = tn or _pick_tile(N, cap=512, align=128, min_tile=256)
    tk = tk or _pick_tile(K, cap=1024, align=128, min_tile=512)

    M_pad = _round_up(M, tm)
    N_pad = _round_up(N, tn)
    K_pad = _round_up(K, tk)

    # v7x megacore: if both parallel axes would have extent 1 (decode-shaped
    # call), split the j axis so both TensorCores get work.  tn stays a
    # multiple of 128 and still divides N_pad.  No-op on v5e/v6e.
    if M_pad // tm == 1 and N_pad // tn == 1 and tn >= 256 and tn % 256 == 0:
        tn //= 2

    grid = (M_pad // tm, N_pad // tn, K_pad // tk)

    # Zero-pad to the tile grid (zeros along K contribute nothing to the dot;
    # padded rows/cols are sliced off the output).
    if (M_pad, K_pad) != (M, K):
        x2 = jnp.pad(x2, ((0, M_pad - M), (0, K_pad - K)))
    w2 = w_kn
    if (K_pad, N_pad) != (K, N):
        w2 = jnp.pad(w2, ((0, K_pad - K), (0, N_pad - N)))
    b2 = bias.astype(jnp.float32).reshape(1, N)
    if N_pad != N:
        b2 = jnp.pad(b2, ((0, 0), (0, N_pad - N)))

    # Cast x to the MXU dtype before the kernel only when x is actually
    # re-read (grid_j >= 3); otherwise the extra wrapper pass costs more HBM
    # than it saves and the in-kernel cast handles it.
    if (mxu_dtype is not None and grid[1] >= 3
            and x2.dtype != jnp.dtype(mxu_dtype)):
        x2 = x2.astype(mxu_dtype)

    xb = jnp.dtype(x2.dtype).itemsize
    wb = jnp.dtype(w2.dtype).itemsize
    ob = jnp.dtype(out_dtype).itemsize

    # Real VMEM footprint: double-buffered ins/outs + f32 accumulator.
    tile_bytes = (
        2 * tm * tk * xb        # x tile, double-buffered
        + 2 * tk * tn * wb      # weight tile, double-buffered
        + 2 * tm * tn * ob      # output tile, double-buffered
        + tm * tn * 4           # f32 accumulator scratch
        + 2 * tn * 4            # bias tile, double-buffered
    )
    try:
        vmem_cap = int(pltpu.get_tpu_info().vmem_capacity_bytes)
    except Exception:
        vmem_cap = 64 * 1024 * 1024  # conservative (v7x physical VMEM)
    vmem_limit = int(min(max(tile_bytes + (2 << 20), 32 * 1024 * 1024),
                         (vmem_cap * 3) // 4))

    # Honest traffic estimate: x is re-read once per j block, W once per i block.
    cost = pl.CostEstimate(
        flops=2 * M_pad * N_pad * K_pad,
        transcendentals=M_pad * N_pad,  # one tanh per output element
        bytes_accessed=(grid[1] * M_pad * K_pad * xb
                        + grid[0] * K_pad * N_pad * wb
                        + N_pad * 4
                        + M_pad * N_pad * ob),
    )

    kernel = functools.partial(_linear_gelu_kernel, mxu_dtype=mxu_dtype)

    out = pl.pallas_call(
        kernel,
        out_shape=jax.ShapeDtypeStruct((M_pad, N_pad), out_dtype),
        grid_spec=pltpu.PrefetchScalarGridSpec(
            num_scalar_prefetch=0,
            grid=grid,
            in_specs=[
                pl.BlockSpec((tm, tk), lambda i, j, k: (i, k)),  # x
                pl.BlockSpec((tk, tn), lambda i, j, k: (k, j)),  # W^T ([K, N])
                pl.BlockSpec((1, tn), lambda i, j, k: (0, j)),   # bias
            ],
            out_specs=pl.BlockSpec((tm, tn), lambda i, j, k: (i, j)),
            scratch_shapes=[pltpu.VMEM((tm, tn), jnp.float32)],
        ),
        compiler_params=pltpu.CompilerParams(
            dimension_semantics=("parallel", "parallel", "arbitrary"),
            vmem_limit_bytes=vmem_limit,
        ),
        cost_estimate=cost,
    )(x2, w2, b2)

    if (M_pad, N_pad) != (M, N):
        out = out[:M, :N]
    return out.reshape(*lead, N)


if __name__ == "__main__":
    # Small, deterministic synthetic setup (no checkpoint loading):
    #   nn.Linear(in_features=32, out_features=32), tokens M = 8.
    in_features = 32
    out_features = 32
    M = 8

    key = jax.random.PRNGKey(0)
    kx, kw, kb = jax.random.split(key, 3)

    x = jax.random.normal(kx, (M, in_features), dtype=jnp.float32)
    # Deterministic parameter init (matches nn.Linear shapes: W [N, K], b [N]).
    bound = 1.0 / (in_features ** 0.5)
    weight = jax.random.uniform(
        kw, (out_features, in_features), minval=-bound, maxval=bound,
        dtype=jnp.float32)
    bias = jax.random.uniform(
        kb, (out_features,), minval=-bound, maxval=bound, dtype=jnp.float32)

    # One-time "model load" prep: [N, K] -> persistent bf16 [K, N] copy.
    w_kn, b_prep = prepare_linear_gelu_params(weight, bias)

    out = linear_gelu(x, w_kn, b_prep)
    out = jax.block_until_ready(out)

    # Reference matching the kernel's compute path exactly
    # (bf16 MXU operands, f32 accumulation, tanh-approx GELU).
    def gelu_tanh(z):
        c = 0.7978845608028654
        return 0.5 * z * (1.0 + jnp.tanh(c * (z + 0.044715 * z ** 3)))

    z_matched = jnp.dot(
        x.astype(jnp.bfloat16), w_kn,
        preferred_element_type=jnp.float32) + bias
    ref_matched = gelu_tanh(z_matched)

    # Full-precision, erf-exact reference (PyTorch F.gelu default), loose tol
    # to cover bf16 matmul + tanh approximation.
    ref_exact = jax.nn.gelu(x @ weight.T + bias, approximate=False)

    assert out.shape == (M, out_features)
    assert out.dtype == x.dtype
    assert jnp.allclose(out, ref_matched, atol=2e-3, rtol=2e-3), \
        "mismatch vs matched-path reference"
    assert jnp.allclose(out, ref_exact, atol=3e-2, rtol=3e-2), \
        "mismatch vs exact f32 reference"

    print("KERNEL_OK")
</pallas_src>

<mosaic_0001>
module attributes {stable_mosaic.version = 11 : i64} {
  func.func @_linear_gelu_kernel(%arg0: i32, %arg1: i32, %arg2: i32, %arg3: memref<8x128xf32, #tpu.memory_space<vmem>>, %arg4: memref<128x128xbf16, #tpu.memory_space<vmem>>, %arg5: memref<1x128xf32, #tpu.memory_space<vmem>>, %arg6: memref<8x128xf32, #tpu.memory_space<vmem>>, %arg7: memref<8x128xf32, #tpu.memory_space<vmem>>) attributes {dimension_semantics = [#tpu.dimension_semantics<parallel>, #tpu.dimension_semantics<parallel>, #tpu.dimension_semantics<arbitrary>], iteration_bounds = array<i64: 1, 1, 1>, scalar_prefetch = 0 : i64, scratch_operands = 1 : i64, tpu.core_type = #tpu.core_type<tc>, window_params = [{transform_indices = @transform_0, window_bounds = array<i64: 8, 128>}, {transform_indices = @transform_1, window_bounds = array<i64: 128, 128>}, {transform_indices = @transform_2, window_bounds = array<i64: 1, 128>}, {transform_indices = @transform_3, window_bounds = array<i64: 8, 128>}]} {
    %c0_i32 = arith.constant 0 : i32
    %0 = arith.cmpi eq, %arg2, %c0_i32 : i32
    %1 = arith.extui %0 : i1 to i32
    %c0_i32_0 = arith.constant 0 : i32
    %2 = arith.cmpi ne, %1, %c0_i32_0 : i32
    scf.if %2 {
      %c0_10 = arith.constant 0 : index
      %c0_11 = arith.constant 0 : index
      %13 = vector.load %arg5[%c0_10, %c0_11] : memref<1x128xf32, #tpu.memory_space<vmem>>, vector<1x128xf32>
      %14 = vector.shape_cast %13 : vector<1x128xf32> to vector<1x128xf32>
      %15 = vector.broadcast %14 : vector<1x128xf32> to vector<8x128xf32>
      %c0_12 = arith.constant 0 : index
      %c0_13 = arith.constant 0 : index
      %16 = vector.load %arg7[%c0_12, %c0_13] : memref<8x128xf32, #tpu.memory_space<vmem>>, vector<8x128xf32>
      tpu.vector_store %arg7[%c0_12, %c0_13], %15 {strides = array<i32>} : memref<8x128xf32, #tpu.memory_space<vmem>>, vector<8x128xf32>,
    } else {
    }
    %c0 = arith.constant 0 : index
    %c0_1 = arith.constant 0 : index
    %3 = vector.load %arg3[%c0, %c0_1] : memref<8x128xf32, #tpu.memory_space<vmem>>, vector<8x128xf32>
    %c0_2 = arith.constant 0 : index
    %c0_3 = arith.constant 0 : index
    %4 = vector.load %arg4[%c0_2, %c0_3] : memref<128x128xbf16, #tpu.memory_space<vmem>>, vector<128x128xbf16>
    %5 = arith.truncf %3 : vector<8x128xf32> to vector<8x128xbf16>
    %c0_4 = arith.constant 0 : index
    %c0_5 = arith.constant 0 : index
    %6 = vector.load %arg7[%c0_4, %c0_5] : memref<8x128xf32, #tpu.memory_space<vmem>>, vector<8x128xf32>
    %cst = arith.constant dense<0.000000e+00> : vector<8x128xf32>
    %7 = tpu.matmul %5, %4, %cst {dimension_numbers = #tpu.dot_dimension_numbers<[1], [0], [0], [1], [0, 0, 1, 1], [], []>} : vector<8x128xbf16>, vector<128x128xbf16>, vector<8x128xf32> -> vector<8x128xf32>
    %8 = arith.addf %6, %7 : vector<8x128xf32>
    %c0_6 = arith.constant 0 : index
    %c0_7 = arith.constant 0 : index
    %9 = vector.load %arg7[%c0_6, %c0_7] : memref<8x128xf32, #tpu.memory_space<vmem>>, vector<8x128xf32>
    tpu.vector_store %arg7[%c0_6, %c0_7], %8 {strides = array<i32>} : memref<8x128xf32, #tpu.memory_space<vmem>>, vector<8x128xf32>,
    %c0_i32_8 = arith.constant 0 : i32
    %10 = arith.cmpi eq, %arg2, %c0_i32_8 : i32
    %11 = arith.extui %10 : i1 to i32
    %c0_i32_9 = arith.constant 0 : i32
    %12 = arith.cmpi ne, %11, %c0_i32_9 : i32
    scf.if %12 {
      %c0_10 = arith.constant 0 : index
      %c0_11 = arith.constant 0 : index
      %13 = vector.load %arg7[%c0_10, %c0_11] : memref<8x128xf32, #tpu.memory_space<vmem>>, vector<8x128xf32>
      %cst_12 = arith.constant 5.000000e-01 : f32
      %14 = vector.broadcast %cst_12 : f32 to vector<8x128xf32>
      %15 = arith.mulf %14, %13 : vector<8x128xf32>
      %16 = arith.mulf %13, %13 : vector<8x128xf32>
      %17 = arith.mulf %16, %13 : vector<8x128xf32>
      %cst_13 = arith.constant 4.471500e-02 : f32
      %18 = vector.broadcast %cst_13 : f32 to vector<8x128xf32>
      %19 = arith.mulf %18, %17 : vector<8x128xf32>
      %20 = arith.addf %13, %19 : vector<8x128xf32>
      %cst_14 = arith.constant 0.797884583 : f32
      %21 = vector.broadcast %cst_14 : f32 to vector<8x128xf32>
      %22 = arith.mulf %21, %20 : vector<8x128xf32>
      %23 = math.tanh %22 : vector<8x128xf32>
      %cst_15 = arith.constant 1.000000e+00 : f32
      %24 = vector.broadcast %cst_15 : f32 to vector<8x128xf32>
      %25 = arith.addf %24, %23 : vector<8x128xf32>
      %26 = arith.mulf %15, %25 : vector<8x128xf32>
      %c0_16 = arith.constant 0 : index
      %c0_17 = arith.constant 0 : index
      %27 = vector.load %arg6[%c0_16, %c0_17] : memref<8x128xf32, #tpu.memory_space<vmem>>, vector<8x128xf32>
      tpu.vector_store %arg6[%c0_16, %c0_17], %26 {strides = array<i32>} : memref<8x128xf32, #tpu.memory_space<vmem>>, vector<8x128xf32>,
    } else {
    }
    return
  }
  func.func @transform_0(%arg0: i32, %arg1: i32, %arg2: i32) -> (i32, i32) {
    %c0_i32 = arith.constant 0 : i32
    return %arg0, %arg2 : i32, i32
  }
  func.func @transform_1(%arg0: i32, %arg1: i32, %arg2: i32) -> (i32, i32) {
    %c0_i32 = arith.constant 0 : i32
    return %arg2, %arg1 : i32, i32
  }
  func.func @transform_2(%arg0: i32, %arg1: i32, %arg2: i32) -> (i32, i32) {
    %c0_i32 = arith.constant 0 : i32
    %c0_i32_0 = arith.constant 0 : i32
    return %c0_i32, %arg1 : i32, i32
  }
  func.func @transform_3(%arg0: i32, %arg1: i32, %arg2: i32) -> (i32, i32) {
    %c0_i32 = arith.constant 0 : i32
    return %arg0, %arg1 : i32, i32
  }
}

</mosaic_0001>

<llo_original>
// kernel: linear_gelu.1
$region0: #{linear_gelu.1}
  #allocation0 [shape = 'u32[]', space=smem, size = 0x4, offset = 0x4, fixed_abs, tag = 'smem constant byte address 0x4 - core index']
  #allocation1 [shape = 'u32[144,128]{1,0:T(1,128)}', space=vmem, size = 0x12000, scoped, tag = 'internal scratch']
  #allocation2 [shape = 'f32[8,128]{1,0:T(8,128)}', space=vmem, size = 0x1000, scoped, tag = 'scratch operand']
  %s0 = inlined_call_operand.vmem [shape: f32[8,128], index: 0, kind: input, shape index: {}]
  %s1 = inlined_call_operand.vmem [shape: bf16[128,128], index: 1, kind: input, shape index: {}]
  %s2 = inlined_call_operand.vmem [shape: f32[1,128], index: 2, kind: input, shape index: {}]
  %s3 = inlined_call_operand.hbm [shape: f32[8,128], index: 3, kind: output, shape index: {}]
  %s4 = sld [smem:[#allocation0]]
  $region30: #{linear_gelu.1} parent=0
    _
  %s6 = ssub.s32 1, %s4
  %s7 = scalar_select 0, %s6, %s4
  $region1: #{linear_gelu.1} parent=0
    #allocation3 [shape = 'u8[4096]{0}', space=vmem, size = 0x1000, scoped, tag = 'output window, operand 0, single buffered']
    #allocation4 [shape = 's32[1]{0}', space=sflag, size = 0x4, scoped, tag = 'scoped memory for linear_gelu.1']
    %8 = vsyncpa [#allocation4], 0
    // Predicated region
    $region2: #{linear_gelu.1} parent=1 // pred_check
      _
    $region3: #{linear_gelu.1} parent=1 // pred_check_branch
      %10 = sbr.rel (0) target = $region5
    $region4: #{linear_gelu.1} parent=1 // pred_region
      _
    $region5: #{linear_gelu.1} parent=1 // pred_fallthru
      _
    // Predicated region
    $region6: #{linear_gelu.1} parent=1 // pred_check
      _
    $region7: #{linear_gelu.1} parent=1 // pred_check_branch
      %12 = sbr.rel (0) target = $region9
    $region8: #{linear_gelu.1} parent=1 // pred_region
      _
    $region9: #{linear_gelu.1} parent=1 // pred_fallthru
      _
    // Predicated region
    $region10: #{linear_gelu.1} parent=1 // pred_check
      _
    $region11: #{linear_gelu.1} parent=1 // pred_check_branch
      %14 = sbr.rel (0) target = $region13
    $region12: #{linear_gelu.1} parent=1 // pred_region
      _
    $region13: #{linear_gelu.1} parent=1 // pred_fallthru
      _
    %p16 = scmp.eq.s32.totalorder 0, 0
    // Predicated region
    $region14: #{linear_gelu.1} parent=1 // pred_check
      %p17 = pneg %p16
    $region15: #{linear_gelu.1} parent=1 // pred_check_branch
      %19 = sbr.rel (%p17) target = $region17
    $region16: #{linear_gelu.1} parent=1 // pred_region
      %v20 = vld [vmem:[%s2] sm:$0x1]
      %v22 = vlaneseq
      %v23 = vshrl.u32 %v22, 7
      %v24 = vsub.s32 0, %v23
      %v25 = vrot.slane %v20, %v24
      %27 = vst [vmem:[#allocation2] sm:$0xff] %v25
    $region17: #{linear_gelu.1} parent=1 // pred_fallthru
      _
    %v28 = vld [vmem:[%s0] sm:$0xff]
    %v29 = vld [vmem:[%s1] sm:$0xf]
    %v30 = vld [vmem:[%s1 + $0x4] sm:$0xf]
    %v31 = vld [vmem:[%s1 + $0x8] sm:$0xf]
    %v32 = vld [vmem:[%s1 + $0xc] sm:$0xf]
    %v33 = vld [vmem:[%s1 + $0x10] sm:$0xf]
    %v34 = vld [vmem:[%s1 + $0x14] sm:$0xf]
    %v35 = vld [vmem:[%s1 + $0x18] sm:$0xf]
    %v36 = vld [vmem:[%s1 + $0x1c] sm:$0xf]
    %v37 = vld [vmem:[%s1 + $0x20] sm:$0xf]
    %v38 = vld [vmem:[%s1 + $0x24] sm:$0xf]
    %v39 = vld [vmem:[%s1 + $0x28] sm:$0xf]
    %v40 = vld [vmem:[%s1 + $0x2c] sm:$0xf]
    %v41 = vld [vmem:[%s1 + $0x30] sm:$0xf]
    %v42 = vld [vmem:[%s1 + $0x34] sm:$0xf]
    %v43 = vld [vmem:[%s1 + $0x38] sm:$0xf]
    %v44 = vld [vmem:[%s1 + $0x3c] sm:$0xf]
    %v45 = vpack.c.bf16 %v28, %v28
    %v46 = vld [vmem:[#allocation2] sm:$0xff]
    %v63 = vunpack.c.l.b16 %v29
    %v64 = vunpack.c.l.b16 %v30
    %v65 = vunpack.c.l.b16 %v31
    %v66 = vunpack.c.l.b16 %v32
    %v67 = vunpack.c.l.b16 %v33
    %v68 = vunpack.c.l.b16 %v34
    %v69 = vunpack.c.l.b16 %v35
    %v70 = vunpack.c.l.b16 %v36
    %v71 = vunpack.c.l.b16 %v37
    %v72 = vunpack.c.l.b16 %v38
    %v73 = vunpack.c.l.b16 %v39
    %v74 = vunpack.c.l.b16 %v40
    %v75 = vunpack.c.l.b16 %v41
    %v76 = vunpack.c.l.b16 %v42
    %v77 = vunpack.c.l.b16 %v43
    %v78 = vunpack.c.l.b16 %v44
    %v79 = vpack.c.b16 %v64, %v63
    %v80 = vpack.c.b16 %v66, %v65
    %v81 = vpack.c.b16 %v68, %v67
    %v82 = vpack.c.b16 %v70, %v69
    %v83 = vpack.c.b16 %v72, %v71
    %v84 = vpack.c.b16 %v74, %v73
    %v85 = vpack.c.b16 %v76, %v75
    %v86 = vpack.c.b16 %v78, %v77
    %95 = vmatprep.subr.bf16.mxu0 0
    %96 = vmatpush1.bf16.msra.mxu0 %v79
    %97 = vmatprep.subr.bf16.mxu0 0
    %98 = vmatpush1.bf16.msra.mxu0 %v80
    %99 = vmatprep.subr.bf16.mxu0 0
    %100 = vmatpush1.bf16.msra.mxu0 %v81
    %101 = vmatprep.subr.bf16.mxu0 0
    %102 = vmatpush1.bf16.msra.mxu0 %v82
    %103 = vmatprep.subr.bf16.mxu0 0
    %104 = vmatpush1.bf16.msra.mxu0 %v83
    %105 = vmatprep.subr.bf16.mxu0 0
    %106 = vmatpush1.bf16.msra.mxu0 %v84
    %107 = vmatprep.subr.bf16.mxu0 0
    %108 = vmatpush1.bf16.msra.mxu0 %v85
    %109 = vmatprep.subr.bf16.mxu0 0
    %110 = vmatpush1.bf16.msra.mxu0 %v86
    %111 = vmatprep.subr.bf16.mxu0 0
    %112 = vmatpush1.bf16.msra.mxu0 0
    %113 = vmatprep.subr.bf16.mxu0 0
    %114 = vmatpush1.bf16.msra.mxu0 0
    %115 = vmatprep.subr.bf16.mxu0 0
    %116 = vmatpush1.bf16.msra.mxu0 0
    %117 = vmatprep.subr.bf16.mxu0 0
    %118 = vmatpush1.bf16.msra.mxu0 0
    %119 = vmatprep.subr.bf16.mxu0 0
    %120 = vmatpush1.bf16.msra.mxu0 0
    %121 = vmatprep.subr.bf16.mxu0 0
    %122 = vmatpush1.bf16.msra.mxu0 0
    %123 = vmatprep.subr.bf16.mxu0 0
    %124 = vmatpush1.bf16.msra.mxu0 0
    %125 = vmatprep.subr.bf16.mxu0 0
    %126 = vmatpush1.bf16.msra.mxu0 0
    %127 = vmatprep.mubr.bf16.mxu0 0
    %128 = vmatmul.mubr.bf16.gmra.mrb[0].mxu0 %v45
    %v129 = vpop.f32.mrb[0].mxu0
    %v130 = vadd.f32 0.0, %v129
    %v131 = vpop.f32.mrb[0].mxu0
    %v132 = vpop.f32.mrb[0].mxu0
    %v133 = vpop.f32.mrb[0].mxu0
    %134 = vdwg.mxu0
    %v135 = vadd.f32 %v46, %v130
    %136 = vst [vmem:[#allocation2] sm:$0xff] %v135
    // Predicated region
    $region18: #{linear_gelu.1} parent=1 // pred_check
      %p137 = pneg %p16
    $region19: #{linear_gelu.1} parent=1 // pred_check_branch
      %139 = sbr.rel (%p137) target = $region21
    $region20: #{linear_gelu.1} parent=1 // pred_region
      %v140 = vld [vmem:[#allocation2] sm:$0xff]
      %v141 = vmul.f32 %v140, 0.5
      %v142 = vmul.f32 %v140, %v140
      %v143 = vmul.f32 %v142, %v140
      %v144 = vmul.f32 %v143, 0.044715
      %v145 = vadd.f32 %v140, %v144
      %v146 = vmul.f32 %v145, 0.7978846
      %v147 = vtanh.pop %v146
      %v148 = vadd.f32 %v147, 1.0
      %v149 = vmul.f32 %v141, %v148
      %150 = vst [vmem:[#allocation3] sm:$0xff] %v149
    $region21: #{linear_gelu.1} parent=1 // pred_fallthru
      _
    // Predicated region
    $region22: #{linear_gelu.1} parent=1 // pred_check
      _
    $region23: #{linear_gelu.1} parent=1 // pred_check_branch
      %152 = sbr.rel (0) target = $region25
    $region24: #{linear_gelu.1} parent=1 // pred_region
      %s154 = ssub.s32 128, 128
      %155 = vsyncadd [#allocation4], %s154
      %s157 = sshll.u32 [#allocation3], 4
      %s158 = int_to_ptr.vmem [resolvable:$true] %s157
      %160 = dma.vmem_to_hbm [thread:$0]  %s158, 128, %s3, [#allocation4]
    $region25: #{linear_gelu.1} parent=1 // pred_fallthru
      _
    // Predicated region
    $region26: #{linear_gelu.1} parent=1 // pred_check
      _
    $region27: #{linear_gelu.1} parent=1 // pred_check_branch
      %162 = sbr.rel (0) target = $region29
    $region28: #{linear_gelu.1} parent=1 // pred_region
      %163 = dma.done [#allocation4], 128
    $region29: #{linear_gelu.1} parent=1 // pred_fallthru
      _
    %164 = vsyncpa [#allocation4], 1

</llo_original>
